<compile_context>
chip_gen: v5e
topology: v5e:2x2
jax: 0.10.0
libtpu: 0.0.40
codegen_flags: <defaults>
</compile_context>

<pallas_src>
import jax
import jax.numpy as jnp
from jax.experimental import pallas as pl
from jax.experimental.pallas import tpu as pltpu


_VMEM = pl.BlockSpec(memory_space=pltpu.MemorySpace.VMEM)

# Matmul operand dtype.  f32 keeps bit-accuracy vs. the reference; bf16 is the
# v6e/v7x fast path (MXU-native) but needs a looser tolerance in the test.
MXU_DTYPE = jnp.float32


def _round_up(n, m):
    return ((n + m - 1) // m) * m


# -----------------------------------------------------------------------------
# Host-side packing (one-time; OUTSIDE the per-call jitted path)
# -----------------------------------------------------------------------------
def pack_params(params):
    """Pack all TinyGRU weights into one weight slab + one bias slab.

    Weight slab (row-stacked, each block's rows rounded to 8, zero-padded to
    `wcols` columns):
        layer 0 : W_x_all0 (I ,3H)  [z|r|h]   input projection
                  W_h_zr0  (H ,2H)  [z|r]     hidden projection
                  W_hh0    (H , H)
        layer l>0: BD_l    (2H,5H)  block_diag(W_x_all_l, W_h_zr_l)
                  W_hh_l   (H , H)
        head    : W_hy     (H , O)
    Bias slab ((L+1) x wcols):
        row l : [b_z | b_r | b_h | 0...]   row L : [b_y | 0...]
    """
    layers = params["layers"]
    L = len(layers)
    H = layers[0]["W_hz"].shape[0]
    I = layers[0]["W_xz"].shape[0]
    O = params["W_hy"].shape[1]
    assert L >= 2, "reference module only defines W_hy/b_y when num_layers >= 2"
    f32 = jnp.float32

    blocks = []
    p0 = layers[0]
    blocks.append(("wx0", jnp.concatenate([p0["W_xz"], p0["W_xr"], p0["W_xh"]], axis=1)))
    blocks.append(("whzr0", jnp.concatenate([p0["W_hz"], p0["W_hr"]], axis=1)))
    blocks.append(("whh0", p0["W_hh"]))
    for l in range(1, L):
        p = layers[l]
        w_x_all = jnp.concatenate([p["W_xz"], p["W_xr"], p["W_xh"]], axis=1)   # (H, 3H)
        w_h_zr = jnp.concatenate([p["W_hz"], p["W_hr"]], axis=1)               # (H, 2H)
        bd = jnp.zeros((2 * H, 5 * H), f32)
        bd = bd.at[:H, :3 * H].set(w_x_all).at[H:, 3 * H:].set(w_h_zr)
        blocks.append((f"bd{l}", bd))
        blocks.append((f"whh{l}", p["W_hh"]))
    blocks.append(("why", params["W_hy"]))

    wcols = max(b.shape[1] for _, b in blocks)
    offsets, padded, off = {}, [], 0
    for name, arr in blocks:
        arr = arr.astype(f32)
        rows = _round_up(arr.shape[0], 8)
        offsets[name] = off
        padded.append(jnp.zeros((rows, wcols), f32).at[:arr.shape[0], :arr.shape[1]].set(arr))
        off += rows
    w_slab = jnp.concatenate(padded, axis=0)                      # (sum_rows, wcols)

    b_rows = []
    for l in range(L):
        p = layers[l]
        b_all = jnp.concatenate([p["b_z"], p["b_r"], p["b_h"]]).astype(f32)    # (3H,)
        b_rows.append(jnp.zeros((wcols,), f32).at[:3 * H].set(b_all))
    b_rows.append(jnp.zeros((wcols,), f32).at[:O].set(params["b_y"].astype(f32)))
    b_slab = jnp.stack(b_rows, axis=0)                            # (L+1, wcols)

    meta = dict(L=L, I=I, H=H, O=O, offsets=offsets)
    return w_slab, b_slab, meta


def pack_x(x, num_layers):
    """Only the first `num_layers` time steps are consumed (reference quirk).
    Flatten them (t-major) to (L*B, I) so the layer-0 projection is one matmul."""
    B, T, I = x.shape
    L = num_layers
    assert T >= L
    return jnp.transpose(x[:, :L, :], (1, 0, 2)).reshape(L * B, I).astype(jnp.float32)


# -----------------------------------------------------------------------------
# Fused Pallas kernel: whole TinyGRU forward in one call
# -----------------------------------------------------------------------------
def _make_kernel(meta, B):
    L, I, H, O = meta["L"], meta["I"], meta["H"], meta["O"]
    offs = meta["offsets"]
    H2, H3, H5 = 2 * H, 3 * H, 5 * H

    def kernel(x_ref, h0_ref, w_ref, b_ref, out_ref, hseq_ref, hfin_ref):
        mx = lambda a: a.astype(MXU_DTYPE)   # no-op for f32; bf16 fast path opt-in

        # Resident weight views: static slices of the single VMEM weight slab.
        wx0 = w_ref[offs["wx0"]:offs["wx0"] + I, 0:H3]                  # (I, 3H)
        whzr0 = w_ref[offs["whzr0"]:offs["whzr0"] + H, 0:H2]            # (H, 2H)
        whh = [w_ref[offs[f"whh{l}"]:offs[f"whh{l}"] + H, 0:H] for l in range(L)]
        bd = [w_ref[offs[f"bd{l}"]:offs[f"bd{l}"] + H2, 0:H5] for l in range(1, L)]
        why = w_ref[offs["why"]:offs["why"] + H, 0:O]                   # (H, O)
        b0 = b_ref[0:1, 0:H3]
        by = b_ref[L:L + 1, 0:O]

        # Layer-0 input projections for all "time" steps, hoisted out of the
        # serial recurrence (bias folded in): one (L*B,I)x(I,3H) MXU push.
        gx0_all = jnp.dot(mx(x_ref[...]), mx(wx0),
                          preferred_element_type=jnp.float32) + b0      # (L*B, 3H)

        h = [h0_ref[l] for l in range(L)]          # each (B, H), live in vregs
        snaps = []                                  # snaps[t][l]
        h_last = []                                 # last-layer state per t

        for t in range(L):   # NOTE: reference iterates num_layers, not seq_len
            snap_t = []
            for l in range(L):
                h_prev = h[l]
                if l == 0:
                    gx = gx0_all[t * B:(t + 1) * B, :]                  # (B, 3H)
                    gh = jnp.dot(mx(h_prev), mx(whzr0),
                                 preferred_element_type=jnp.float32)    # (B, 2H)
                    zr = jax.nn.sigmoid(gx[:, 0:H2] + gh)               # fused z|r
                    ht_pre = gx[:, H2:H3]
                else:
                    # One MXU push for gx AND gh: [h_{l-1} | h_prev] @ block_diag
                    lhs = jnp.concatenate([h[l - 1], h_prev], axis=1)   # (B, 2H)
                    g = jnp.dot(mx(lhs), mx(bd[l - 1]),
                                preferred_element_type=jnp.float32)
                    g = g + b_ref[l:l + 1, 0:H5]                        # (B, 5H)
                    zr = jax.nn.sigmoid(g[:, 0:H2] + g[:, H3:H5])       # fused z|r
                    ht_pre = g[:, H2:H3]

                z = zr[:, 0:H]
                r = zr[:, H:H2]
                h_tilde = jnp.tanh(
                    ht_pre + jnp.dot(mx(r * h_prev), mx(whh[l]),
                                     preferred_element_type=jnp.float32))
                # (1 - z) * h + z * h_tilde  ==  h + z * (h_tilde - h)
                h_new = h_prev + z * (h_tilde - h_prev)
                h[l] = h_new
                snap_t.append(h_new)
            snaps.append(snap_t)
            h_last.append(h[L - 1])

        # Output projection hoisted out of the loop: one (L*B,H)x(H,O) push,
        # single store (t-major rows; wrapper does the free reshape/transpose).
        y = jnp.dot(mx(jnp.concatenate(h_last, axis=0)), mx(why),
                    preferred_element_type=jnp.float32) + by            # (L*B, O)
        out_ref[...] = y

        # Coalesced writes: one store per output slab (layer-major, then t).
        hseq_ref[...] = jnp.concatenate(
            [snaps[t][l] for l in range(L) for t in range(L)], axis=0)  # (L*L*B, H)
        hfin_ref[...] = jnp.concatenate(h, axis=0)                      # (L*B, H)

    return kernel


def make_forward(meta, B):
    """Build the jitted forward; everything static (shapes/offsets) is closed over."""
    L, H, O = meta["L"], meta["H"], meta["O"]
    kernel = _make_kernel(meta, B)

    @jax.jit
    def forward(x_flat, h0, w_slab, b_slab):
        out, hseq, hfin = pl.pallas_call(
            kernel,
            out_shape=(
                jax.ShapeDtypeStruct((L * B, O), jnp.float32),
                jax.ShapeDtypeStruct((L * L * B, H), jnp.float32),
                jax.ShapeDtypeStruct((L * B, H), jnp.float32),
            ),
            in_specs=[_VMEM, _VMEM, _VMEM, _VMEM],
            out_specs=(_VMEM, _VMEM, _VMEM),
        )(x_flat, h0, w_slab, b_slab)
        outputs = jnp.transpose(out.reshape(L, B, O), (1, 0, 2))        # (B, L, O)
        h_seq_stacked = hseq.reshape(L, L, B, H)                        # (layer, t, B, H)
        h_final = hfin.reshape(L, B, H)
        return outputs, h_seq_stacked, h_final

    return forward


# -----------------------------------------------------------------------------
# Pure-JAX reference (for correctness check)
# -----------------------------------------------------------------------------
def tiny_gru_reference(params, x, h_prev=None):
    B, T, _ = x.shape
    L = len(params["layers"])
    H = params["layers"][0]["W_hz"].shape[0]
    if h_prev is None:
        h_prev = jnp.zeros((L, B, H), dtype=jnp.float32)
    h_current = [h_prev[l] for l in range(L)]
    outputs, h_seq = [], []
    for t in range(L):
        x_t = x[:, t, :]
        for li in range(L):
            p = params["layers"][li]
            inp = x_t if li == 0 else h_current[li - 1]
            h = h_current[li]
            z = jax.nn.sigmoid(inp @ p["W_xz"] + h @ p["W_hz"] + p["b_z"])
            r = jax.nn.sigmoid(inp @ p["W_xr"] + h @ p["W_hr"] + p["b_r"])
            h_tilde = jnp.tanh(inp @ p["W_xh"] + (r * h) @ p["W_hh"] + p["b_h"])
            h_current[li] = (1.0 - z) * h + z * h_tilde
        outputs.append(h_current[-1] @ params["W_hy"] + params["b_y"])
        h_seq.append(jnp.stack(h_current, axis=0))
    return (jnp.stack(outputs, axis=1),
            jnp.stack(h_seq, axis=1),
            jnp.stack(h_current, axis=0))


# -----------------------------------------------------------------------------
# Deterministic parameter init (mirrors __init__: randn * 0.01, zero bias)
# -----------------------------------------------------------------------------
def init_params(key, input_size, hidden_size, output_size, num_layers):
    def randn(k, shape):
        return (0.01 * jax.random.normal(k, shape)).astype(jnp.float32)

    layers = []
    for li in range(num_layers):
        in_dim = input_size if li == 0 else hidden_size
        key, *ks = jax.random.split(key, 7)
        layers.append({
            "W_xz": randn(ks[0], (in_dim, hidden_size)),
            "W_hz": randn(ks[1], (hidden_size, hidden_size)),
            "b_z": jnp.zeros((hidden_size,), jnp.float32),
            "W_xr": randn(ks[2], (in_dim, hidden_size)),
            "W_hr": randn(ks[3], (hidden_size, hidden_size)),
            "b_r": jnp.zeros((hidden_size,), jnp.float32),
            "W_xh": randn(ks[4], (in_dim, hidden_size)),
            "W_hh": randn(ks[5], (hidden_size, hidden_size)),
            "b_h": jnp.zeros((hidden_size,), jnp.float32),
        })
    key, k_hy = jax.random.split(key)
    return {
        "layers": layers,
        "W_hy": randn(k_hy, (hidden_size, output_size)),
        "b_y": jnp.zeros((output_size,), jnp.float32),
    }


# -----------------------------------------------------------------------------
if __name__ == "__main__":
    B, T, I, H, O, L = 2, 8, 16, 32, 8, 2   # num_layers >= 2 required (W_hy quirk)

    key = jax.random.PRNGKey(0)
    k_x, k_p = jax.random.split(key)
    x = jax.random.normal(k_x, (B, T, I), dtype=jnp.float32)
    params = init_params(k_p, I, H, O, L)

    # One-time host-side packing (outside the per-call jitted path).
    w_slab, b_slab, meta = pack_params(params)
    x_flat = pack_x(x, L)
    h0 = jnp.zeros((L, B, H), jnp.float32)

    fwd = make_forward(meta, B)
    outputs, h_seq_stacked, h_final = jax.block_until_ready(
        fwd(x_flat, h0, w_slab, b_slab))

    # sanity: shapes match the PyTorch module's return values
    assert outputs.shape == (B, L, O)
    assert h_seq_stacked.shape == (L, L, B, H)
    assert h_final.shape == (L, B, H)

    # numerical check vs pure-JAX reference
    ref_out, ref_hseq, ref_hfin = tiny_gru_reference(params, x)
    assert jnp.allclose(outputs, ref_out, atol=1e-5)
    assert jnp.allclose(h_seq_stacked, ref_hseq, atol=1e-5)
    assert jnp.allclose(h_final, ref_hfin, atol=1e-5)

    print("KERNEL_OK")
</pallas_src>

<mosaic_0001>
module attributes {stable_mosaic.version = 11 : i64} {
  func.func @kernel(%arg0: memref<4x16xf32, #tpu.memory_space<vmem>>, %arg1: memref<2x2x32xf32, #tpu.memory_space<vmem>>, %arg2: memref<208x160xf32, #tpu.memory_space<vmem>>, %arg3: memref<3x160xf32, #tpu.memory_space<vmem>>, %arg4: memref<4x8xf32, #tpu.memory_space<vmem>>, %arg5: memref<8x32xf32, #tpu.memory_space<vmem>>, %arg6: memref<4x32xf32, #tpu.memory_space<vmem>>) attributes {dimension_semantics = [], scalar_prefetch = 0 : i64, scratch_operands = 0 : i64, tpu.core_type = #tpu.core_type<tc>} {
    %c0 = arith.constant 0 : index
    %c0_0 = arith.constant 0 : index
    %0 = vector.load %arg2[%c0, %c0_0] : memref<208x160xf32, #tpu.memory_space<vmem>>, vector<16x96xf32>
    %c16 = arith.constant 16 : index
    %c0_1 = arith.constant 0 : index
    %1 = vector.load %arg2[%c16, %c0_1] : memref<208x160xf32, #tpu.memory_space<vmem>>, vector<32x64xf32>
    %c48 = arith.constant 48 : index
    %c0_2 = arith.constant 0 : index
    %2 = vector.load %arg2[%c48, %c0_2] : memref<208x160xf32, #tpu.memory_space<vmem>>, vector<32x32xf32>
    %c144 = arith.constant 144 : index
    %c0_3 = arith.constant 0 : index
    %3 = vector.load %arg2[%c144, %c0_3] : memref<208x160xf32, #tpu.memory_space<vmem>>, vector<32x32xf32>
    %c80 = arith.constant 80 : index
    %c0_4 = arith.constant 0 : index
    %4 = vector.load %arg2[%c80, %c0_4] : memref<208x160xf32, #tpu.memory_space<vmem>>, vector<64x160xf32>
    %c176 = arith.constant 176 : index
    %c0_5 = arith.constant 0 : index
    %5 = vector.load %arg2[%c176, %c0_5] : memref<208x160xf32, #tpu.memory_space<vmem>>, vector<32x8xf32>
    %c0_6 = arith.constant 0 : index
    %c0_7 = arith.constant 0 : index
    %6 = vector.load %arg3[%c0_6, %c0_7] : memref<3x160xf32, #tpu.memory_space<vmem>>, vector<1x96xf32>
    %c2 = arith.constant 2 : index
    %c0_8 = arith.constant 0 : index
    %7 = vector.load %arg3[%c2, %c0_8] : memref<3x160xf32, #tpu.memory_space<vmem>>, vector<1x8xf32>
    %c0_9 = arith.constant 0 : index
    %c0_10 = arith.constant 0 : index
    %8 = vector.load %arg0[%c0_9, %c0_10] : memref<4x16xf32, #tpu.memory_space<vmem>>, vector<4x16xf32>
    %cst = arith.constant dense<0.000000e+00> : vector<4x96xf32>
    %9 = tpu.matmul %8, %0, %cst {dimension_numbers = #tpu.dot_dimension_numbers<[1], [0], [0], [1], [0, 0, 1, 1], [], []>} : vector<4x16xf32>, vector<16x96xf32>, vector<4x96xf32> -> vector<4x96xf32>
    %10 = vector.broadcast %6 : vector<1x96xf32> to vector<4x96xf32>
    %11 = arith.addf %9, %10 : vector<4x96xf32>
    %c0_11 = arith.constant 0 : index
    %c0_12 = arith.constant 0 : index
    %c0_13 = arith.constant 0 : index
    %12 = vector.load %arg1[%c0_11, %c0_12, %c0_13] : memref<2x2x32xf32, #tpu.memory_space<vmem>>, vector<1x2x32xf32>
    %13 = vector.shape_cast %12 : vector<1x2x32xf32> to vector<2x32xf32>
    %c1 = arith.constant 1 : index
    %c0_14 = arith.constant 0 : index
    %c0_15 = arith.constant 0 : index
    %14 = vector.load %arg1[%c1, %c0_14, %c0_15] : memref<2x2x32xf32, #tpu.memory_space<vmem>>, vector<1x2x32xf32>
    %15 = vector.shape_cast %14 : vector<1x2x32xf32> to vector<2x32xf32>
    %16 = vector.extract_strided_slice %11 {offsets = [0, 0], sizes = [2, 96], strides = [1, 1]} : vector<4x96xf32> to vector<2x96xf32>
    %cst_16 = arith.constant dense<0.000000e+00> : vector<2x64xf32>
    %17 = tpu.matmul %13, %1, %cst_16 {dimension_numbers = #tpu.dot_dimension_numbers<[1], [0], [0], [1], [0, 0, 1, 1], [], []>} : vector<2x32xf32>, vector<32x64xf32>, vector<2x64xf32> -> vector<2x64xf32>
    %18 = vector.extract_strided_slice %16 {offsets = [0, 0], sizes = [2, 64], strides = [1, 1]} : vector<2x96xf32> to vector<2x64xf32>
    %19 = arith.addf %18, %17 : vector<2x64xf32>
    %20 = arith.negf %19 : vector<2x64xf32>
    %21 = math.exp %20 : vector<2x64xf32>
    %cst_17 = arith.constant 1.000000e+00 : f32
    %22 = vector.broadcast %cst_17 : f32 to vector<2x64xf32>
    %23 = arith.addf %22, %21 : vector<2x64xf32>
    %24 = arith.divf %22, %23 : vector<2x64xf32>
    %25 = vector.extract_strided_slice %16 {offsets = [0, 64], sizes = [2, 32], strides = [1, 1]} : vector<2x96xf32> to vector<2x32xf32>
    %26 = vector.extract_strided_slice %24 {offsets = [0, 0], sizes = [2, 32], strides = [1, 1]} : vector<2x64xf32> to vector<2x32xf32>
    %27 = vector.extract_strided_slice %24 {offsets = [0, 32], sizes = [2, 32], strides = [1, 1]} : vector<2x64xf32> to vector<2x32xf32>
    %28 = arith.mulf %27, %13 : vector<2x32xf32>
    %cst_18 = arith.constant dense<0.000000e+00> : vector<2x32xf32>
    %29 = tpu.matmul %28, %2, %cst_18 {dimension_numbers = #tpu.dot_dimension_numbers<[1], [0], [0], [1], [0, 0, 1, 1], [], []>} : vector<2x32xf32>, vector<32x32xf32>, vector<2x32xf32> -> vector<2x32xf32>
    %30 = arith.addf %25, %29 : vector<2x32xf32>
    %31 = math.tanh %30 : vector<2x32xf32>
    %32 = arith.subf %31, %13 : vector<2x32xf32>
    %33 = arith.mulf %26, %32 : vector<2x32xf32>
    %34 = arith.addf %13, %33 : vector<2x32xf32>
    %35 = tpu.concatenate %34, %15 in 1 : vector<2x32xf32>, vector<2x32xf32> -> vector<2x64xf32>
    %cst_19 = arith.constant dense<0.000000e+00> : vector<2x160xf32>
    %36 = tpu.matmul %35, %4, %cst_19 {dimension_numbers = #tpu.dot_dimension_numbers<[1], [0], [0], [1], [0, 0, 1, 1], [], []>} : vector<2x64xf32>, vector<64x160xf32>, vector<2x160xf32> -> vector<2x160xf32>
    %c1_20 = arith.constant 1 : index
    %c0_21 = arith.constant 0 : index
    %37 = vector.load %arg3[%c1_20, %c0_21] : memref<3x160xf32, #tpu.memory_space<vmem>>, vector<1x160xf32>
    %38 = vector.broadcast %37 : vector<1x160xf32> to vector<2x160xf32>
    %39 = arith.addf %36, %38 : vector<2x160xf32>
    %40 = vector.extract_strided_slice %39 {offsets = [0, 0], sizes = [2, 64], strides = [1, 1]} : vector<2x160xf32> to vector<2x64xf32>
    %41 = vector.extract_strided_slice %39 {offsets = [0, 96], sizes = [2, 64], strides = [1, 1]} : vector<2x160xf32> to vector<2x64xf32>
    %42 = arith.addf %40, %41 : vector<2x64xf32>
    %43 = arith.negf %42 : vector<2x64xf32>
    %44 = math.exp %43 : vector<2x64xf32>
    %cst_22 = arith.constant 1.000000e+00 : f32
    %45 = vector.broadcast %cst_22 : f32 to vector<2x64xf32>
    %46 = arith.addf %45, %44 : vector<2x64xf32>
    %47 = arith.divf %45, %46 : vector<2x64xf32>
    %48 = vector.extract_strided_slice %39 {offsets = [0, 64], sizes = [2, 32], strides = [1, 1]} : vector<2x160xf32> to vector<2x32xf32>
    %49 = vector.extract_strided_slice %47 {offsets = [0, 0], sizes = [2, 32], strides = [1, 1]} : vector<2x64xf32> to vector<2x32xf32>
    %50 = vector.extract_strided_slice %47 {offsets = [0, 32], sizes = [2, 32], strides = [1, 1]} : vector<2x64xf32> to vector<2x32xf32>
    %51 = arith.mulf %50, %15 : vector<2x32xf32>
    %cst_23 = arith.constant dense<0.000000e+00> : vector<2x32xf32>
    %52 = tpu.matmul %51, %3, %cst_23 {dimension_numbers = #tpu.dot_dimension_numbers<[1], [0], [0], [1], [0, 0, 1, 1], [], []>} : vector<2x32xf32>, vector<32x32xf32>, vector<2x32xf32> -> vector<2x32xf32>
    %53 = arith.addf %48, %52 : vector<2x32xf32>
    %54 = math.tanh %53 : vector<2x32xf32>
    %55 = arith.subf %54, %15 : vector<2x32xf32>
    %56 = arith.mulf %49, %55 : vector<2x32xf32>
    %57 = arith.addf %15, %56 : vector<2x32xf32>
    %58 = vector.extract_strided_slice %11 {offsets = [2, 0], sizes = [2, 96], strides = [1, 1]} : vector<4x96xf32> to vector<2x96xf32>
    %cst_24 = arith.constant dense<0.000000e+00> : vector<2x64xf32>
    %59 = tpu.matmul %34, %1, %cst_24 {dimension_numbers = #tpu.dot_dimension_numbers<[1], [0], [0], [1], [0, 0, 1, 1], [], []>} : vector<2x32xf32>, vector<32x64xf32>, vector<2x64xf32> -> vector<2x64xf32>
    %60 = vector.extract_strided_slice %58 {offsets = [0, 0], sizes = [2, 64], strides = [1, 1]} : vector<2x96xf32> to vector<2x64xf32>
    %61 = arith.addf %60, %59 : vector<2x64xf32>
    %62 = arith.negf %61 : vector<2x64xf32>
    %63 = math.exp %62 : vector<2x64xf32>
    %cst_25 = arith.constant 1.000000e+00 : f32
    %64 = vector.broadcast %cst_25 : f32 to vector<2x64xf32>
    %65 = arith.addf %64, %63 : vector<2x64xf32>
    %66 = arith.divf %64, %65 : vector<2x64xf32>
    %67 = vector.extract_strided_slice %58 {offsets = [0, 64], sizes = [2, 32], strides = [1, 1]} : vector<2x96xf32> to vector<2x32xf32>
    %68 = vector.extract_strided_slice %66 {offsets = [0, 0], sizes = [2, 32], strides = [1, 1]} : vector<2x64xf32> to vector<2x32xf32>
    %69 = vector.extract_strided_slice %66 {offsets = [0, 32], sizes = [2, 32], strides = [1, 1]} : vector<2x64xf32> to vector<2x32xf32>
    %70 = arith.mulf %69, %34 : vector<2x32xf32>
    %cst_26 = arith.constant dense<0.000000e+00> : vector<2x32xf32>
    %71 = tpu.matmul %70, %2, %cst_26 {dimension_numbers = #tpu.dot_dimension_numbers<[1], [0], [0], [1], [0, 0, 1, 1], [], []>} : vector<2x32xf32>, vector<32x32xf32>, vector<2x32xf32> -> vector<2x32xf32>
    %72 = arith.addf %67, %71 : vector<2x32xf32>
    %73 = math.tanh %72 : vector<2x32xf32>
    %74 = arith.subf %73, %34 : vector<2x32xf32>
    %75 = arith.mulf %68, %74 : vector<2x32xf32>
    %76 = arith.addf %34, %75 : vector<2x32xf32>
    %77 = tpu.concatenate %76, %57 in 1 : vector<2x32xf32>, vector<2x32xf32> -> vector<2x64xf32>
    %cst_27 = arith.constant dense<0.000000e+00> : vector<2x160xf32>
    %78 = tpu.matmul %77, %4, %cst_27 {dimension_numbers = #tpu.dot_dimension_numbers<[1], [0], [0], [1], [0, 0, 1, 1], [], []>} : vector<2x64xf32>, vector<64x160xf32>, vector<2x160xf32> -> vector<2x160xf32>
    %c1_28 = arith.constant 1 : index
    %c0_29 = arith.constant 0 : index
    %79 = vector.load %arg3[%c1_28, %c0_29] : memref<3x160xf32, #tpu.memory_space<vmem>>, vector<1x160xf32>
    %80 = vector.broadcast %79 : vector<1x160xf32> to vector<2x160xf32>
    %81 = arith.addf %78, %80 : vector<2x160xf32>
    %82 = vector.extract_strided_slice %81 {offsets = [0, 0], sizes = [2, 64], strides = [1, 1]} : vector<2x160xf32> to vector<2x64xf32>
    %83 = vector.extract_strided_slice %81 {offsets = [0, 96], sizes = [2, 64], strides = [1, 1]} : vector<2x160xf32> to vector<2x64xf32>
    %84 = arith.addf %82, %83 : vector<2x64xf32>
    %85 = arith.negf %84 : vector<2x64xf32>
    %86 = math.exp %85 : vector<2x64xf32>
    %cst_30 = arith.constant 1.000000e+00 : f32
    %87 = vector.broadcast %cst_30 : f32 to vector<2x64xf32>
    %88 = arith.addf %87, %86 : vector<2x64xf32>
    %89 = arith.divf %87, %88 : vector<2x64xf32>
    %90 = vector.extract_strided_slice %81 {offsets = [0, 64], sizes = [2, 32], strides = [1, 1]} : vector<2x160xf32> to vector<2x32xf32>
    %91 = vector.extract_strided_slice %89 {offsets = [0, 0], sizes = [2, 32], strides = [1, 1]} : vector<2x64xf32> to vector<2x32xf32>
    %92 = vector.extract_strided_slice %89 {offsets = [0, 32], sizes = [2, 32], strides = [1, 1]} : vector<2x64xf32> to vector<2x32xf32>
    %93 = arith.mulf %92, %57 : vector<2x32xf32>
    %cst_31 = arith.constant dense<0.000000e+00> : vector<2x32xf32>
    %94 = tpu.matmul %93, %3, %cst_31 {dimension_numbers = #tpu.dot_dimension_numbers<[1], [0], [0], [1], [0, 0, 1, 1], [], []>} : vector<2x32xf32>, vector<32x32xf32>, vector<2x32xf32> -> vector<2x32xf32>
    %95 = arith.addf %90, %94 : vector<2x32xf32>
    %96 = math.tanh %95 : vector<2x32xf32>
    %97 = arith.subf %96, %57 : vector<2x32xf32>
    %98 = arith.mulf %91, %97 : vector<2x32xf32>
    %99 = arith.addf %57, %98 : vector<2x32xf32>
    %100 = tpu.concatenate %57, %99 in 0 : vector<2x32xf32>, vector<2x32xf32> -> vector<4x32xf32>
    %cst_32 = arith.constant dense<0.000000e+00> : vector<4x8xf32>
    %101 = tpu.matmul %100, %5, %cst_32 {dimension_numbers = #tpu.dot_dimension_numbers<[1], [0], [0], [1], [0, 0, 1, 1], [], []>} : vector<4x32xf32>, vector<32x8xf32>, vector<4x8xf32> -> vector<4x8xf32>
    %102 = vector.broadcast %7 : vector<1x8xf32> to vector<4x8xf32>
    %103 = arith.addf %101, %102 : vector<4x8xf32>
    %c0_33 = arith.constant 0 : index
    %c0_34 = arith.constant 0 : index
    %104 = vector.load %arg4[%c0_33, %c0_34] : memref<4x8xf32, #tpu.memory_space<vmem>>, vector<4x8xf32>
    tpu.vector_store %arg4[%c0_33, %c0_34], %103 {strides = array<i32>} : memref<4x8xf32, #tpu.memory_space<vmem>>, vector<4x8xf32>,
    %105 = tpu.concatenate %34, %76, %57, %99 in 0 : vector<2x32xf32>, vector<2x32xf32>, vector<2x32xf32>, vector<2x32xf32> -> vector<8x32xf32>
    %c0_35 = arith.constant 0 : index
    %c0_36 = arith.constant 0 : index
    %106 = vector.load %arg5[%c0_35, %c0_36] : memref<8x32xf32, #tpu.memory_space<vmem>>, vector<8x32xf32>
    tpu.vector_store %arg5[%c0_35, %c0_36], %105 {strides = array<i32>} : memref<8x32xf32, #tpu.memory_space<vmem>>, vector<8x32xf32>,
    %107 = tpu.concatenate %76, %99 in 0 : vector<2x32xf32>, vector<2x32xf32> -> vector<4x32xf32>
    %c0_37 = arith.constant 0 : index
    %c0_38 = arith.constant 0 : index
    %108 = vector.load %arg6[%c0_37, %c0_38] : memref<4x32xf32, #tpu.memory_space<vmem>>, vector<4x32xf32>
    tpu.vector_store %arg6[%c0_37, %c0_38], %107 {strides = array<i32>} : memref<4x32xf32, #tpu.memory_space<vmem>>, vector<4x32xf32>,
    return
  }
}

</mosaic_0001>

<llo_original>
// kernel: forward.1
$region0: #{forward.1}
  #allocation0 [shape = 'u32[]', space=smem, size = 0x4, offset = 0x4, fixed_abs, tag = 'smem constant byte address 0x4 - core index']
  #allocation1 [shape = 'u32[72,128]{1,0:T(1,128)}', space=vmem, size = 0x9000, scoped, tag = 'internal scratch']
  %s0 = inlined_call_operand.vmem [shape: f32[4,16], index: 0, kind: input, shape index: {}]
  %s1 = inlined_call_operand.vmem [shape: f32[2,2,32], index: 1, kind: input, shape index: {}]
  %s2 = inlined_call_operand.vmem [shape: f32[208,160], index: 2, kind: input, shape index: {}]
  %s3 = inlined_call_operand.vmem [shape: f32[3,160], index: 3, kind: input, shape index: {}]
  %s4 = inlined_call_operand.vmem [shape: f32[4,8], index: 4, kind: output, shape index: {0}]
  %s5 = inlined_call_operand.hbm [shape: f32[8,32], index: 5, kind: output, shape index: {1}]
  %s6 = inlined_call_operand.hbm [shape: f32[4,32], index: 6, kind: output, shape index: {2}]
  %7 = xla_tuple %s4, %s5, %s6
  %s8 = sld [smem:[#allocation0]]
  $region42: #{forward.1} parent=0
    _
  %s10 = ssub.s32 1, %s8
  %s11 = scalar_select 0, %s10, %s8
  $region1: #{forward.1} parent=0
    #allocation2 [shape = 'u8[4096]{0}', space=vmem, size = 0x1000, scoped, tag = 'output window, operand 1, single buffered']
    #allocation3 [shape = 's32[1]{0}', space=sflag, size = 0x4, scoped, tag = 'scoped memory for forward.1']
    #allocation4 [shape = 'u8[2048]{0}', space=vmem, size = 0x800, scoped, tag = 'output window, operand 2, single buffered']
    #allocation5 [shape = 's32[1]{0}', space=sflag, size = 0x4, scoped, tag = 'scoped memory for forward.1']
    %12 = vsyncpa [#allocation3], 0
    %13 = vsyncpa [#allocation5], 0
    // Predicated region
    $region2: #{forward.1} parent=1 // pred_check
      _
    $region3: #{forward.1} parent=1 // pred_check_branch
      %15 = sbr.rel (0) target = $region5
    $region4: #{forward.1} parent=1 // pred_region
      _
    $region5: #{forward.1} parent=1 // pred_fallthru
      _
    // Predicated region
    $region6: #{forward.1} parent=1 // pred_check
      _
    $region7: #{forward.1} parent=1 // pred_check_branch
      %17 = sbr.rel (0) target = $region9
    $region8: #{forward.1} parent=1 // pred_region
      _
    $region9: #{forward.1} parent=1 // pred_fallthru
      _
    // Predicated region
    $region10: #{forward.1} parent=1 // pred_check
      _
    $region11: #{forward.1} parent=1 // pred_check_branch
      %19 = sbr.rel (0) target = $region13
    $region12: #{forward.1} parent=1 // pred_region
      _
    $region13: #{forward.1} parent=1 // pred_fallthru
      _
    // Predicated region
    $region14: #{forward.1} parent=1 // pred_check
      _
    $region15: #{forward.1} parent=1 // pred_check_branch
      %21 = sbr.rel (0) target = $region17
    $region16: #{forward.1} parent=1 // pred_region
      _
    $region17: #{forward.1} parent=1 // pred_fallthru
      _
    %v22 = vld [vmem:[%s2] sm:$0xff]
    %v23 = vld [vmem:[%s2 + $0x10] sm:$0xff]
    %v24 = vld [vmem:[%s2 + $0x20] sm:$0xff]
    %v25 = vld [vmem:[%s2 + $0x30] sm:$0xff]
    %v26 = vld [vmem:[%s2 + $0x40] sm:$0xff]
    %v27 = vld [vmem:[%s2 + $0x50] sm:$0xff]
    %v28 = vld [vmem:[%s2 + $0x60] sm:$0xff]
    %v29 = vld [vmem:[%s2 + $0x70] sm:$0xff]
    %v30 = vld [vmem:[%s2 + $0x80] sm:$0xff]
    %v31 = vld [vmem:[%s2 + $0x90] sm:$0xff]
    %v32 = vld [vmem:[%s2 + $0x120] sm:$0xff]
    %v33 = vld [vmem:[%s2 + $0x130] sm:$0xff]
    %v34 = vld [vmem:[%s2 + $0x140] sm:$0xff]
    %v35 = vld [vmem:[%s2 + $0x150] sm:$0xff]
    %v36 = vld [vmem:[%s2 + $0xa0] sm:$0xff]
    %v37 = vld [vmem:[%s2 + $0xa8] sm:$0xff]
    %v38 = vld [vmem:[%s2 + $0xb0] sm:$0xff]
    %v39 = vld [vmem:[%s2 + $0xb8] sm:$0xff]
    %v40 = vld [vmem:[%s2 + $0xc0] sm:$0xff]
    %v41 = vld [vmem:[%s2 + $0xc8] sm:$0xff]
    %v42 = vld [vmem:[%s2 + $0xd0] sm:$0xff]
    %v43 = vld [vmem:[%s2 + $0xd8] sm:$0xff]
    %v44 = vld [vmem:[%s2 + $0xe0] sm:$0xff]
    %v45 = vld [vmem:[%s2 + $0xe8] sm:$0xff]
    %v46 = vld [vmem:[%s2 + $0xf0] sm:$0xff]
    %v47 = vld [vmem:[%s2 + $0xf8] sm:$0xff]
    %v48 = vld [vmem:[%s2 + $0x100] sm:$0xff]
    %v49 = vld [vmem:[%s2 + $0x108] sm:$0xff]
    %v50 = vld [vmem:[%s2 + $0x110] sm:$0xff]
    %v51 = vld [vmem:[%s2 + $0x118] sm:$0xff]
    %v52 = vld [vmem:[%s2 + $0x160] sm:$0xff]
    %v53 = vld [vmem:[%s2 + $0x170] sm:$0xff]
    %v54 = vld [vmem:[%s2 + $0x180] sm:$0xff]
    %v55 = vld [vmem:[%s2 + $0x190] sm:$0xff]
    %v56 = vld [vmem:[%s3] sm:$0x1]
    %v57 = vld [vmem:[%s3 + $0x2] sm:$0x1]
    %v58 = vld [vmem:[%s0] sm:$0xf]
    %v59 = vperm.slane %v56, 0
    %vm60 = vcmask 130048
    %v62 = vsel %vm60, %v58, 0
    %64 = vmatpush.msra.mxu0 0.0
    %65 = vmatpush.msra.mxu0 0.0
    %66 = vmatpush.msra.mxu0 0.0
    %67 = vmatpush.msra.mxu0 0.0
    %68 = vmatpush.msra.mxu0 0.0
    %69 = vmatpush.msra.mxu0 0.0
    %70 = vmatpush.msra.mxu0 0.0
    %71 = vmatpush.msra.mxu0 0.0
    %72 = vmatpush.msra.mxu0 0.0
    %73 = vmatpush.msra.mxu0 0.0
    %74 = vmatpush.msra.mxu0 0.0
    %75 = vmatpush.msra.mxu0 0.0
    %76 = vmatpush.msra.mxu0 0.0
    %77 = vmatpush.msra.mxu0 0.0
    %78 = vmatpush.msra.mxu0 %v23
    %79 = vmatpush.msra.mxu0 %v22
    %80 = vmatmul.f32.gmra.mxu0 %v62
    %v81 = vpop.f32.mrf.mxu0
    %v82 = vadd.f32 %v59, %v81
    %83 = vdwg.mxu0
    %v84 = vld [vmem:[%s1] sm:$0x3]
    %s85 = scalar_lea.vmem %s1, 2
    %v86 = vld [vmem:[%s85] sm:$0x3]
    %vm87 = vcmask 261120
    %v89 = vsel %vm87, %v84, 0
    %91 = vmatpush.msra.mxu0 0.0
    %92 = vmatpush.msra.mxu0 0.0
    %93 = vmatpush.msra.mxu0 0.0
    %94 = vmatpush.msra.mxu0 0.0
    %95 = vmatpush.msra.mxu0 0.0
    %96 = vmatpush.msra.mxu0 0.0
    %97 = vmatpush.msra.mxu0 0.0
    %98 = vmatpush.msra.mxu0 0.0
    %99 = vmatpush.msra.mxu0 0.0
    %100 = vmatpush.msra.mxu0 0.0
    %101 = vmatpush.msra.mxu0 0.0
    %102 = vmatpush.msra.mxu0 0.0
    %103 = vmatpush.msra.mxu0 %v27
    %104 = vmatpush.msra.mxu0 %v26
    %105 = vmatpush.msra.mxu0 %v25
    %106 = vmatpush.msra.mxu0 %v24
    %107 = vmatmul.f32.gmra.mxu0 %v89
    %v108 = vpop.f32.mrf.mxu0
    %v109 = vadd.f32 0.0, %v108
    %110 = vdwg.mxu0
    %v111 = vadd.f32 %v82, %v109
    %v112 = vxor.u32 %v111, 2147483648
    %v113 = vmul.f32 %v112, 1.442695
    %v114 = vpow.pop %v113
    %v115 = vadd.f32 %v114, 1.0
    %v116 = vrcp.pop %v115
    %v117 = vmul.f32 %v115, %v116
    %v118 = vsub.f32 1.0, %v117
    %v119 = vmul.f32 %v116, %v118
    %v120 = vadd.f32 %v116, %v119
    %vm121 = vweird.f32 %v115
    %vm122 = vweird.f32 %v116
    %vm123 = vmor %vm121, %vm122
    %v124 = vsel %vm123, %v116, %v120
    %v125 = vand.u32 2147483647, %v115
    %vm126 = vcmp.eq.f32.partialorder %v125, 8.507059e+37
    %v127 = vand.u32 %v115, 2147483648
    %v128 = vor.u32 1.1754944e-38, %v127
    %v129 = vsel %vm126, %v128, %v124
    %v130 = vmul.f32 1.0, %v129
    %131 = vrot.lane.b32.xlu0 %v84, 32
    %v132 = vpop.permute.xlu0 %131
    %v134 = vmul.f32 %v130, %v132
    %136 = vrot.lane.b32.xlu0 %v134, 96
    %v137 = vpop.permute.xlu0 %136
    %v138 = vsel %vm87, %v137, 0
    %140 = vmatpush.msra.mxu0 0.0
    %141 = vmatpush.msra.mxu0 0.0
    %142 = vmatpush.msra.mxu0 0.0
    %143 = vmatpush.msra.mxu0 0.0
    %144 = vmatpush.msra.mxu0 0.0
    %145 = vmatpush.msra.mxu0 0.0
    %146 = vmatpush.msra.mxu0 0.0
    %147 = vmatpush.msra.mxu0 0.0
    %148 = vmatpush.msra.mxu0 0.0
    %149 = vmatpush.msra.mxu0 0.0
    %150 = vmatpush.msra.mxu0 0.0
    %151 = vmatpush.msra.mxu0 0.0
    %152 = vmatpush.msra.mxu0 %v31
    %153 = vmatpush.msra.mxu0 %v30
    %154 = vmatpush.msra.mxu0 %v29
    %155 = vmatpush.msra.mxu0 %v28
    %156 = vmatmul.f32.gmra.mxu0 %v138
    %v157 = vpop.f32.mrf.mxu0
    %v158 = vadd.f32 0.0, %v157
    %159 = vdwg.mxu0
    %161 = vrot.lane.b32.xlu0 %v158, 64
    %v162 = vpop.permute.xlu0 %161
    %v164 = vadd.f32 %v82, %v162
    %v165 = vtanh.pop %v164
    %166 = vrot.lane.b32.xlu0 %v84, 64
    %v167 = vpop.permute.xlu0 %166
    %v169 = vsub.f32 %v165, %v167
    %171 = vrot.lane.b32.xlu0 %v169, 64
    %v172 = vpop.permute.xlu0 %171
    %v174 = vmul.f32 %v130, %v172
    %v175 = vadd.f32 %v84, %v174
    %177 = vrot.lane.b32.xlu0 %v86, 32
    %v178 = vpop.permute.xlu0 %177
    %v180 = vsel %vm87, %v175, %v178
    %s181 = scalar_lea.vmem %s3, 1
    %v182 = vld [vmem:[%s181] ss:$4 sm:$0x3]
    %v184 = vperm.slane %v182, 0
    %v185 = vperm.slane %v182, 1
    %vm188 = vcmask 523264
    %v190 = vsel %vm188, %v180, 0
    %192 = vmatpush.msra.mxu0 0.0
    %193 = vmatpush.msra.mxu0 0.0
    %194 = vmatpush.msra.mxu0 0.0
    %195 = vmatpush.msra.mxu0 0.0
    %196 = vmatpush.msra.mxu0 0.0
    %197 = vmatpush.msra.mxu0 0.0
    %198 = vmatpush.msra.mxu0 0.0
    %199 = vmatpush.msra.mxu0 0.0
    %200 = vmatpush.msra.mxu0 %v50
    %201 = vmatpush.msra.mxu0 %v48
    %202 = vmatpush.msra.mxu0 %v46
    %203 = vmatpush.msra.mxu0 %v44
    %204 = vmatpush.msra.mxu0 %v42
    %205 = vmatpush.msra.mxu0 %v40
    %206 = vmatpush.msra.mxu0 %v38
    %207 = vmatpush.msra.mxu0 %v36
    %208 = vmatmul.f32.gmra.mxu0 %v190
    %v209 = vpop.f32.mrf.mxu0
    %v210 = vadd.f32 %v184, %v209
    %211 = vdwg.mxu0
    %212 = vmatpush.msra.mxu0 0.0
    %213 = vmatpush.msra.mxu0 0.0
    %214 = vmatpush.msra.mxu0 0.0
    %215 = vmatpush.msra.mxu0 0.0
    %216 = vmatpush.msra.mxu0 0.0
    %217 = vmatpush.msra.mxu0 0.0
    %218 = vmatpush.msra.mxu0 0.0
    %219 = vmatpush.msra.mxu0 0.0
    %220 = vmatpush.msra.mxu0 %v51
    %221 = vmatpush.msra.mxu0 %v49
    %222 = vmatpush.msra.mxu0 %v47
    %223 = vmatpush.msra.mxu0 %v45
    %224 = vmatpush.msra.mxu0 %v43
    %225 = vmatpush.msra.mxu0 %v41
    %226 = vmatpush.msra.mxu0 %v39
    %227 = vmatpush.msra.mxu0 %v37
    %228 = vmatmul.f32.gmra.mxu0 %v190
    %v229 = vpop.f32.mrf.mxu0
    %v230 = vadd.f32 %v185, %v229
    %231 = vdwg.mxu0
    %234 = vrot.lane.b32.xlu0 %v210, 32
    %v235 = vpop.permute.xlu0 %234
    %236 = vrot.lane.b32.xlu0 %v230, 32
    %v237 = vpop.permute.xlu0 %236
    %v238 = vsel %vm87, %v235, %v237
    %v240 = vadd.f32 %v210, %v238
    %v241 = vxor.u32 %v240, 2147483648
    %v242 = vmul.f32 %v241, 1.442695
    %v243 = vpow.pop %v242
    %v244 = vadd.f32 %v243, 1.0
    %v245 = vrcp.pop %v244
    %v246 = vmul.f32 %v244, %v245
    %v247 = vsub.f32 1.0, %v246
    %v248 = vmul.f32 %v245, %v247
    %v249 = vadd.f32 %v245, %v248
    %vm250 = vweird.f32 %v244
    %vm251 = vweird.f32 %v245
    %vm252 = vmor %vm250, %vm251
    %v253 = vsel %vm252, %v245, %v249
    %v254 = vand.u32 2147483647, %v244
    %vm255 = vcmp.eq.f32.partialorder %v254, 8.507059e+37
    %v256 = vand.u32 %v244, 2147483648
    %v257 = vor.u32 1.1754944e-38, %v256
    %v258 = vsel %vm255, %v257, %v253
    %v259 = vmul.f32 1.0, %v258
    %v260 = vmul.f32 %v259, %v178
    %262 = vrot.lane.b32.xlu0 %v260, 96
    %v263 = vpop.permute.xlu0 %262
    %v264 = vsel %vm87, %v263, 0
    %266 = vmatpush.msra.mxu0 0.0
    %267 = vmatpush.msra.mxu0 0.0
    %268 = vmatpush.msra.mxu0 0.0
    %269 = vmatpush.msra.mxu0 0.0
    %270 = vmatpush.msra.mxu0 0.0
    %271 = vmatpush.msra.mxu0 0.0
    %272 = vmatpush.msra.mxu0 0.0
    %273 = vmatpush.msra.mxu0 0.0
    %274 = vmatpush.msra.mxu0 0.0
    %275 = vmatpush.msra.mxu0 0.0
    %276 = vmatpush.msra.mxu0 0.0
    %277 = vmatpush.msra.mxu0 0.0
    %278 = vmatpush.msra.mxu0 %v35
    %279 = vmatpush.msra.mxu0 %v34
    %280 = vmatpush.msra.mxu0 %v33
    %281 = vmatpush.msra.mxu0 %v32
    %282 = vmatmul.f32.gmra.mxu0 %v264
    %v283 = vpop.f32.mrf.mxu0
    %v284 = vadd.f32 0.0, %v283
    %285 = vdwg.mxu0
    %287 = vrot.lane.b32.xlu0 %v284, 64
    %v288 = vpop.permute.xlu0 %287
    %v290 = vadd.f32 %v210, %v288
    %v291 = vtanh.pop %v290
    %292 = vrot.lane.b32.xlu0 %v86, 64
    %v293 = vpop.permute.xlu0 %292
    %v295 = vsub.f32 %v291, %v293
    %297 = vrot.lane.b32.xlu0 %v295, 64
    %v298 = vpop.permute.xlu0 %297
    %v300 = vmul.f32 %v259, %v298
    %v301 = vadd.f32 %v86, %v300
    %v303 = vsel %vm87, %v175, 0
    %305 = vmatpush.msra.mxu0 0.0
    %306 = vmatpush.msra.mxu0 0.0
    %307 = vmatpush.msra.mxu0 0.0
    %308 = vmatpush.msra.mxu0 0.0
    %309 = vmatpush.msra.mxu0 0.0
    %310 = vmatpush.msra.mxu0 0.0
    %311 = vmatpush.msra.mxu0 0.0
    %312 = vmatpush.msra.mxu0 0.0
    %313 = vmatpush.msra.mxu0 0.0
    %314 = vmatpush.msra.mxu0 0.0
    %315 = vmatpush.msra.mxu0 0.0
    %316 = vmatpush.msra.mxu0 0.0
    %317 = vmatpush.msra.mxu0 %v27
    %318 = vmatpush.msra.mxu0 %v26
    %319 = vmatpush.msra.mxu0 %v25
    %320 = vmatpush.msra.mxu0 %v24
    %321 = vmatmul.f32.gmra.mxu0 %v303
    %v322 = vpop.f32.mrf.mxu0
    %v323 = vadd.f32 0.0, %v322
    %324 = vdwg.mxu0
    %v326 = vrot.slane %v323, 6
    %v328 = vadd.f32 %v82, %v326
    %v329 = vxor.u32 %v328, 2147483648
    %v330 = vmul.f32 %v329, 1.442695
    %v331 = vpow.pop %v330
    %v332 = vadd.f32 %v331, 1.0
    %v333 = vrcp.pop %v332
    %v334 = vmul.f32 %v332, %v333
    %v335 = vsub.f32 1.0, %v334
    %v336 = vmul.f32 %v333, %v335
    %v337 = vadd.f32 %v333, %v336
    %vm338 = vweird.f32 %v332
    %vm339 = vweird.f32 %v333
    %vm340 = vmor %vm338, %vm339
    %v341 = vsel %vm340, %v333, %v337
    %v342 = vand.u32 2147483647, %v332
    %vm343 = vcmp.eq.f32.partialorder %v342, 8.507059e+37
    %v344 = vand.u32 %v332, 2147483648
    %v345 = vor.u32 1.1754944e-38, %v344
    %v346 = vsel %vm343, %v345, %v341
    %v347 = vmul.f32 1.0, %v346
    %v348 = vrot.slane %v175, 6
    %349 = vrot.lane.b32.xlu0 %v348, 32
    %v350 = vpop.permute.xlu0 %349
    %v352 = vmul.f32 %v347, %v350
    %v354 = vrot.slane %v352, 2
    %355 = vrot.lane.b32.xlu0 %v354, 96
    %v356 = vpop.permute.xlu0 %355
    %v357 = vsel %vm87, %v356, 0
    %359 = vmatpush.msra.mxu0 0.0
    %360 = vmatpush.msra.mxu0 0.0
    %361 = vmatpush.msra.mxu0 0.0
    %362 = vmatpush.msra.mxu0 0.0
    %363 = vmatpush.msra.mxu0 0.0
    %364 = vmatpush.msra.mxu0 0.0
    %365 = vmatpush.msra.mxu0 0.0
    %366 = vmatpush.msra.mxu0 0.0
    %367 = vmatpush.msra.mxu0 0.0
    %368 = vmatpush.msra.mxu0 0.0
    %369 = vmatpush.msra.mxu0 0.0
    %370 = vmatpush.msra.mxu0 0.0
    %371 = vmatpush.msra.mxu0 %v31
    %372 = vmatpush.msra.mxu0 %v30
    %373 = vmatpush.msra.mxu0 %v29
    %374 = vmatpush.msra.mxu0 %v28
    %375 = vmatmul.f32.gmra.mxu0 %v357
    %v376 = vpop.f32.mrf.mxu0
    %v377 = vadd.f32 0.0, %v376
    %378 = vdwg.mxu0
    %v380 = vrot.slane %v377, 6
    %381 = vrot.lane.b32.xlu0 %v380, 64
    %v382 = vpop.permute.xlu0 %381
    %v384 = vadd.f32 %v82, %v382
    %v385 = vtanh.pop %v384
    %386 = vrot.lane.b32.xlu0 %v348, 64
    %v387 = vpop.permute.xlu0 %386
    %v389 = vsub.f32 %v385, %v387
    %391 = vrot.lane.b32.xlu0 %v389, 64
    %v392 = vpop.permute.xlu0 %391
    %v394 = vmul.f32 %v347, %v392
    %v396 = vrot.slane %v394, 2
    %v398 = vadd.f32 %v175, %v396
    %400 = vrot.lane.b32.xlu0 %v301, 32
    %v401 = vpop.permute.xlu0 %400
    %v403 = vsel %vm87, %v398, %v401
    %v405 = vsel %vm188, %v403, 0
    %407 = vmatpush.msra.mxu0 0.0
    %408 = vmatpush.msra.mxu0 0.0
    %409 = vmatpush.msra.mxu0 0.0
    %410 = vmatpush.msra.mxu0 0.0
    %411 = vmatpush.msra.mxu0 0.0
    %412 = vmatpush.msra.mxu0 0.0
    %413 = vmatpush.msra.mxu0 0.0
    %414 = vmatpush.msra.mxu0 0.0
    %415 = vmatpush.msra.mxu0 %v50
    %416 = vmatpush.msra.mxu0 %v48
    %417 = vmatpush.msra.mxu0 %v46
    %418 = vmatpush.msra.mxu0 %v44
    %419 = vmatpush.msra.mxu0 %v42
    %420 = vmatpush.msra.mxu0 %v40
    %421 = vmatpush.msra.mxu0 %v38
    %422 = vmatpush.msra.mxu0 %v36
    %423 = vmatmul.f32.gmra.mxu0 %v405
    %v424 = vpop.f32.mrf.mxu0
    %v425 = vadd.f32 %v184, %v424
    %426 = vdwg.mxu0
    %427 = vmatpush.msra.mxu0 0.0
    %428 = vmatpush.msra.mxu0 0.0
    %429 = vmatpush.msra.mxu0 0.0
    %430 = vmatpush.msra.mxu0 0.0
    %431 = vmatpush.msra.mxu0 0.0
    %432 = vmatpush.msra.mxu0 0.0
    %433 = vmatpush.msra.mxu0 0.0
    %434 = vmatpush.msra.mxu0 0.0
    %435 = vmatpush.msra.mxu0 %v51
    %436 = vmatpush.msra.mxu0 %v49
    %437 = vmatpush.msra.mxu0 %v47
    %438 = vmatpush.msra.mxu0 %v45
    %439 = vmatpush.msra.mxu0 %v43
    %440 = vmatpush.msra.mxu0 %v41
    %441 = vmatpush.msra.mxu0 %v39
    %442 = vmatpush.msra.mxu0 %v37
    %443 = vmatmul.f32.gmra.mxu0 %v405
    %v444 = vpop.f32.mrf.mxu0
    %v445 = vadd.f32 %v185, %v444
    %446 = vdwg.mxu0
    %449 = vrot.lane.b32.xlu0 %v425, 32
    %v450 = vpop.permute.xlu0 %449
    %451 = vrot.lane.b32.xlu0 %v445, 32
    %v452 = vpop.permute.xlu0 %451
    %v453 = vsel %vm87, %v450, %v452
    %v455 = vadd.f32 %v425, %v453
    %v456 = vxor.u32 %v455, 2147483648
    %v457 = vmul.f32 %v456, 1.442695
    %v458 = vpow.pop %v457
    %v459 = vadd.f32 %v458, 1.0
    %v460 = vrcp.pop %v459
    %v461 = vmul.f32 %v459, %v460
    %v462 = vsub.f32 1.0, %v461
    %v463 = vmul.f32 %v460, %v462
    %v464 = vadd.f32 %v460, %v463
    %vm465 = vweird.f32 %v459
    %vm466 = vweird.f32 %v460
    %vm467 = vmor %vm465, %vm466
    %v468 = vsel %vm467, %v460, %v464
    %v469 = vand.u32 2147483647, %v459
    %vm470 = vcmp.eq.f32.partialorder %v469, 8.507059e+37
    %v471 = vand.u32 %v459, 2147483648
    %v472 = vor.u32 1.1754944e-38, %v471
    %v473 = vsel %vm470, %v472, %v468
    %v474 = vmul.f32 1.0, %v473
    %v475 = vmul.f32 %v474, %v401
    %477 = vrot.lane.b32.xlu0 %v475, 96
    %v478 = vpop.permute.xlu0 %477
    %v479 = vsel %vm87, %v478, 0
    %481 = vmatpush.msra.mxu0 0.0
    %482 = vmatpush.msra.mxu0 0.0
    %483 = vmatpush.msra.mxu0 0.0
    %484 = vmatpush.msra.mxu0 0.0
    %485 = vmatpush.msra.mxu0 0.0
    %486 = vmatpush.msra.mxu0 0.0
    %487 = vmatpush.msra.mxu0 0.0
    %488 = vmatpush.msra.mxu0 0.0
    %489 = vmatpush.msra.mxu0 0.0
    %490 = vmatpush.msra.mxu0 0.0
    %491 = vmatpush.msra.mxu0 0.0
    %492 = vmatpush.msra.mxu0 0.0
    %493 = vmatpush.msra.mxu0 %v35
    %494 = vmatpush.msra.mxu0 %v34
    %495 = vmatpush.msra.mxu0 %v33
    %496 = vmatpush.msra.mxu0 %v32
    %497 = vmatmul.f32.gmra.mxu0 %v479
    %v498 = vpop.f32.mrf.mxu0
    %v499 = vadd.f32 0.0, %v498
    %500 = vdwg.mxu0
    %502 = vrot.lane.b32.xlu0 %v499, 64
    %v503 = vpop.permute.xlu0 %502
    %v505 = vadd.f32 %v425, %v503
    %v506 = vtanh.pop %v505
    %507 = vrot.lane.b32.xlu0 %v301, 64
    %v508 = vpop.permute.xlu0 %507
    %v510 = vsub.f32 %v506, %v508
    %512 = vrot.lane.b32.xlu0 %v510, 64
    %v513 = vpop.permute.xlu0 %512
    %v515 = vmul.f32 %v474, %v513
    %v516 = vadd.f32 %v301, %v515
    %v518 = vrot.slane %v516, 6
    %vm520 = vcmask 1041408
    %v521 = vsel %vm520, %v301, %v518
    %v522 = vperm.slane %v57, 0
    %v524 = vsel %vm87, %v521, 0
    %526 = vmatpush.msra.mxu0 0.0
    %527 = vmatpush.msra.mxu0 0.0
    %528 = vmatpush.msra.mxu0 0.0
    %529 = vmatpush.msra.mxu0 0.0
    %530 = vmatpush.msra.mxu0 0.0
    %531 = vmatpush.msra.mxu0 0.0
    %532 = vmatpush.msra.mxu0 0.0
    %533 = vmatpush.msra.mxu0 0.0
    %534 = vmatpush.msra.mxu0 0.0
    %535 = vmatpush.msra.mxu0 0.0
    %536 = vmatpush.msra.mxu0 0.0
    %537 = vmatpush.msra.mxu0 0.0
    %538 = vmatpush.msra.mxu0 %v55
    %539 = vmatpush.msra.mxu0 %v54
    %540 = vmatpush.msra.mxu0 %v53
    %541 = vmatpush.msra.mxu0 %v52
    %542 = vmatmul.f32.gmra.mxu0 %v524
    %v543 = vpop.f32.mrf.mxu0
    %v544 = vadd.f32 %v522, %v543
    %545 = vdwg.mxu0
    %vm546 = vcmask 60416
    %547 = vst.msk [vmem:[%s4] sm:$0xf] %vm546, %v544
    %v549 = vrot.slane %v398, 6
    %v551 = vrot.slane %v301, 4
    %v553 = vrot.slane %v516, 2
    %v555 = vsel %vm520, %v175, %v549
    %vm556 = vcmask 1043456
    %v557 = vsel %vm556, %v555, %v551
    %vm558 = vcmask 1045504
    %v559 = vsel %vm558, %v557, %v553
    %560 = vst.msk [vmem:[#allocation2] sm:$0xff] %vm87, %v559
    %v561 = vsel %vm520, %v398, %v518
    %vm562 = vcmask 257024
    %563 = vst.msk [vmem:[#allocation4] sm:$0xf] %vm562, %v561
    // Predicated region
    $region18: #{forward.1} parent=1 // pred_check
      _
    $region19: #{forward.1} parent=1 // pred_check_branch
      %565 = sbr.rel (0) target = $region21
    $region20: #{forward.1} parent=1 // pred_region
      _
    $region21: #{forward.1} parent=1 // pred_fallthru
      _
    // Predicated region
    $region22: #{forward.1} parent=1 // pred_check
      _
    $region23: #{forward.1} parent=1 // pred_check_branch
      %567 = sbr.rel (0) target = $region25
    $region24: #{forward.1} parent=1 // pred_region
      %569 = vsyncadd [#allocation3], 0
      %s571 = sshll.u32 [#allocation2], 4
      %s572 = int_to_ptr.vmem [resolvable:$true] %s571
      %s573 = sshll.u32 %s5, 4
      %s574 = int_to_ptr.hbm [resolvable:$true] %s573
      %576 = dma.vmem_to_hbm [thread:$0]  %s572, 128, %s574, [#allocation3]
    $region25: #{forward.1} parent=1 // pred_fallthru
      _
    // Predicated region
    $region26: #{forward.1} parent=1 // pred_check
      _
    $region27: #{forward.1} parent=1 // pred_check_branch
      %578 = sbr.rel (0) target = $region29
    $region28: #{forward.1} parent=1 // pred_region
      %580 = vsyncadd [#allocation5], 0
      %s582 = sshll.u32 [#allocation4], 4
      %s583 = int_to_ptr.vmem [resolvable:$true] %s582
      %s584 = sshll.u32 %s6, 4
      %s585 = int_to_ptr.hbm [resolvable:$true] %s584
      %587 = dma.vmem_to_hbm [thread:$0]  %s583, 64, %s585, [#allocation5]
    $region29: #{forward.1} parent=1 // pred_fallthru
      _
    // Predicated region
    $region30: #{forward.1} parent=1 // pred_check
      _
    $region31: #{forward.1} parent=1 // pred_check_branch
      %589 = sbr.rel (0) target = $region33
    $region32: #{forward.1} parent=1 // pred_region
      _
    $region33: #{forward.1} parent=1 // pred_fallthru
      _
    // Predicated region
    $region34: #{forward.1} parent=1 // pred_check
      _
    $region35: #{forward.1} parent=1 // pred_check_branch
      %591 = sbr.rel (0) target = $region37
    $region36: #{forward.1} parent=1 // pred_region
      %593 = dma.done [#allocation3], 128
    $region37: #{forward.1} parent=1 // pred_fallthru
      _
    // Predicated region
    $region38: #{forward.1} parent=1 // pred_check
      _
    $region39: #{forward.1} parent=1 // pred_check_branch
      %595 = sbr.rel (0) target = $region41
    $region40: #{forward.1} parent=1 // pred_region
      %597 = dma.done [#allocation5], 64
    $region41: #{forward.1} parent=1 // pred_fallthru
      _
    %598 = vsyncpa [#allocation3], 1
    %599 = vsyncpa [#allocation5], 1

</llo_original>
